<compile_context>
chip_gen: v7x
topology: tpu7x:2x2x1
jax: 0.10.0
libtpu: 0.0.40
codegen_flags: <defaults>
</compile_context>

<pallas_src>
import functools

import jax
import jax.numpy as jnp
from jax.experimental import pallas as pl
from jax.experimental.pallas import tpu as pltpu

_VMEM_LIMIT = 48 * 1024 * 1024
_CONV_VMEM_BUDGET = 24 * 1024 * 1024
_POOL_IN_BLOCK_BUDGET = 4 * 1024 * 1024


# ----------------------------------------------------------------------------
# Fused conv (valid, stride 1) + bias + MFM kernel
# ----------------------------------------------------------------------------
def _conv_mfm_kernel(*args, kh, kw, th, wo, cin, oc, n_views):
    view_refs = args[:n_views]
    w_ref, b_ref, o_ref = args[n_views], args[n_views + 1], args[n_views + 2]
    half = oc // 2

    acc = jnp.zeros((th * wo, oc), jnp.float32)
    for dy in range(kh):
        src = view_refs[dy] if n_views > 1 else view_refs[0]
        r0 = 0 if n_views > 1 else dy
        for dx in range(kw):
            patch = src[0, r0:r0 + th, dx:dx + wo, :].reshape(th * wo, cin)
            wtap = w_ref[dy, dx]                       # (cin, oc)
            if cin == 1:
                acc = acc + patch * wtap               # rank-1 tap on the VPU
            else:
                acc = acc + jnp.dot(patch, wtap,
                                    preferred_element_type=jnp.float32)
    acc = acc + b_ref[...]
    # MFM: columns were permuted so pair partners sit at c and c + oc//2,
    # so max of halves == MaxPool3d((2,1,1),(2,1,1)) over channels.
    out = jnp.maximum(acc[:, :half], acc[:, half:])
    o_ref[0] = out.reshape(th, wo, half).astype(o_ref.dtype)


def _pick_row_tile(H, W, Cin, kh, kw, O, budget):
    """Largest output-row tile whose VMEM working set fits the budget."""
    Ho, Wo = H - kh + 1, W - kw + 1
    half = O // 2

    def est_bytes(th, tiled):
        n_views = kh if (tiled and kh > 1) else 1
        in_rows = th if tiled else H
        elems = (2 * n_views * in_rows * W * Cin   # double-buffered input views
                 + 2 * th * Wo * half              # double-buffered output
                 + th * Wo * O                     # f32 accumulator
                 + 2 * th * Wo * Cin)              # patch transients
        return 4 * elems

    if est_bytes(Ho, False) <= budget:
        return Ho                                  # whole image per grid step
    th = Ho
    while th > 8 and est_bytes(th, True) > budget:
        th = max(1, th // 2)
    return max(1, th)


def conv_mfm(x, w, b, *, row_tile=None):
    """x:(N,H,W,Cin), w:(kh,kw,Cin,O) MFM-permuted, b:(1,O) MFM-permuted.
    Returns MFM(conv_valid(x) + b): (N, H-kh+1, W-kw+1, O//2), float32."""
    N, H, W, Cin = x.shape
    kh, kw, Cin2, O = w.shape
    assert Cin == Cin2 and O % 2 == 0
    Ho, Wo = H - kh + 1, W - kw + 1
    half = O // 2

    th = row_tile if row_tile is not None else _pick_row_tile(
        H, W, Cin, kh, kw, O, _CONV_VMEM_BUDGET)
    th = min(th, Ho)
    nrt = pl.cdiv(Ho, th)

    if nrt == 1:
        views, in_rows = [x], H            # halo lives inside the single block
    elif kh == 1:
        views, in_rows = [x], th           # 1x1 conv: no halo needed
    else:
        # kh row-shifted views supply the halo with plain blocked tiling.
        views = [jax.lax.slice_in_dim(x, dy, dy + Ho, axis=1)
                 for dy in range(kh)]
        in_rows = th
    n_views = len(views)

    kernel = functools.partial(_conv_mfm_kernel, kh=kh, kw=kw, th=th, wo=Wo,
                               cin=Cin, oc=O, n_views=n_views)
    in_specs = (
        [pl.BlockSpec((1, in_rows, W, Cin), lambda n, i: (n, i, 0, 0))] * n_views
        + [pl.BlockSpec((kh, kw, Cin, O), lambda n, i: (0, 0, 0, 0)),
           pl.BlockSpec((1, O), lambda n, i: (0, 0))])
    return pl.pallas_call(
        kernel,
        out_shape=jax.ShapeDtypeStruct((N, Ho, Wo, half), jnp.float32),
        grid=(N, nrt),
        in_specs=in_specs,
        out_specs=pl.BlockSpec((1, th, Wo, half), lambda n, i: (n, i, 0, 0)),
        compiler_params=pltpu.CompilerParams(
            dimension_semantics=("parallel", "parallel"),
            vmem_limit_bytes=_VMEM_LIMIT),
    )(*views, w, b)


# ----------------------------------------------------------------------------
# MaxPool2d(2, 2) kernel (floor mode), NHWC
# ----------------------------------------------------------------------------
def _maxpool2x2_kernel(x_ref, o_ref):
    c = o_ref.shape[-1]
    v = x_ref[0]                               # (tr, 2, Wp, 2*C)
    v = jnp.max(v, axis=1)                     # row-pair max -> (tr, Wp, 2*C)
    o_ref[0] = jnp.maximum(v[:, :, :c], v[:, :, c:])   # column-pair max


def maxpool2x2(x, *, row_tile=None):
    N, H, W, C = x.shape
    Hp, Wp = H // 2, W // 2
    if H != 2 * Hp or W != 2 * Wp:             # floor mode crop (no-op here)
        x = x[:, :2 * Hp, :2 * Wp, :]
    # Free row-major regrouping: y[n,hp,r,wp,s*C+c] == x[n,2hp+r,2wp+s,c]
    y = x.reshape(N, Hp, 2, Wp, 2 * C)

    if row_tile is None:
        row_tile = max(1, _POOL_IN_BLOCK_BUDGET // (2 * W * C * 4))
    tr = min(row_tile, Hp)
    return pl.pallas_call(
        _maxpool2x2_kernel,
        out_shape=jax.ShapeDtypeStruct((N, Hp, Wp, C), x.dtype),
        grid=(N, pl.cdiv(Hp, tr)),
        in_specs=[pl.BlockSpec((1, tr, 2, Wp, 2 * C),
                               lambda n, i: (n, i, 0, 0, 0))],
        out_specs=pl.BlockSpec((1, tr, Wp, C), lambda n, i: (n, i, 0, 0)),
        compiler_params=pltpu.CompilerParams(
            dimension_semantics=("parallel", "parallel")),
    )(y)


# ----------------------------------------------------------------------------
# Fused fc1 -> relu -> fc2 -> log_softmax kernel
# ----------------------------------------------------------------------------
def _fc_head_kernel(x_ref, w1_ref, b1_ref, w2_ref, b2_ref, o_ref):
    h = jnp.dot(x_ref[...], w1_ref[...], preferred_element_type=jnp.float32)
    h = jnp.maximum(h + b1_ref[...], 0.0)
    z = jnp.dot(h, w2_ref[...], preferred_element_type=jnp.float32) + b2_ref[...]
    m = jnp.max(z, axis=-1, keepdims=True)
    s = z - m
    lse = jnp.log(jnp.sum(jnp.exp(s), axis=-1, keepdims=True))
    o_ref[...] = s - lse


def fc_head(x, w1, b1, w2, b2):
    return pl.pallas_call(
        _fc_head_kernel,
        out_shape=jax.ShapeDtypeStruct((x.shape[0], w2.shape[1]), jnp.float32),
    )(x, w1, b1, w2, b2)


# ----------------------------------------------------------------------------
# Parameters (torch layout at init, converted once for the kernels)
# ----------------------------------------------------------------------------
_CONV_DEFS = {
    "conv1": (32, 1, 3), "conv2a": (32, 16, 1), "conv2": (48, 16, 3),
    "conv3a": (48, 24, 1), "conv3": (64, 24, 3), "conv4a": (64, 32, 1),
    "conv4": (32, 32, 3), "conv5a": (32, 16, 3), "conv5": (16, 16, 3),
}
_FC_DEFS = {"fc1": (128, 1512), "fc2": (2, 128)}


def init_params(key):
    """Torch-layout params: conv (O,Cin,kh,kw) + (O,), fc (out,in) + (out,)."""
    params = {}
    keys = jax.random.split(key, 2 * (len(_CONV_DEFS) + len(_FC_DEFS)))
    ki = 0
    for name, (o, i, k) in _CONV_DEFS.items():
        fan_in, fan_out = i * k * k, o * k * k
        std = (2.0 / (fan_in + fan_out)) ** 0.5                # xavier_normal_
        params[name + "_w"] = jax.random.normal(
            keys[ki], (o, i, k, k), jnp.float32) * std
        bound = 1.0 / (fan_in ** 0.5)                          # torch conv bias init
        params[name + "_b"] = jax.random.uniform(
            keys[ki + 1], (o,), jnp.float32, -bound, bound)
        ki += 2
    for name, (o, i) in _FC_DEFS.items():
        bound = 1.0 / (i ** 0.5)                               # torch Linear init
        params[name + "_w"] = jax.random.uniform(
            keys[ki], (o, i), jnp.float32, -bound, bound)
        params[name + "_b"] = jax.random.uniform(
            keys[ki + 1], (o,), jnp.float32, -bound, bound)
        ki += 2
    return params


def _convert_conv(w_oihw, b):
    """OIHW torch weight -> HWIO with MFM column permutation; bias -> (1,O)."""
    o = w_oihw.shape[0]
    perm = jnp.concatenate([jnp.arange(0, o, 2), jnp.arange(1, o, 2)])
    w = jnp.transpose(w_oihw, (2, 3, 1, 0))[..., perm]
    return w, b[perm].reshape(1, o)


def prepare_params(raw):
    p = {}
    for name in _CONV_DEFS:
        p[name + "_w"], p[name + "_b"] = _convert_conv(
            raw[name + "_w"], raw[name + "_b"])
    for name in _FC_DEFS:
        p[name + "_w"] = raw[name + "_w"].T                    # (in, out)
        p[name + "_b"] = raw[name + "_b"].reshape(1, -1)
    return p


# ----------------------------------------------------------------------------
# Forward pass (mirrors Net.forward)
# ----------------------------------------------------------------------------
def net_forward(x_nchw, params):
    p = params
    x = jnp.transpose(x_nchw, (0, 2, 3, 1)).astype(jnp.float32)  # -> NHWC

    x = maxpool2x2(conv_mfm(x, p["conv1_w"], p["conv1_b"]))
    x = conv_mfm(x, p["conv2a_w"], p["conv2a_b"])
    x = maxpool2x2(conv_mfm(x, p["conv2_w"], p["conv2_b"]))
    x = conv_mfm(x, p["conv3a_w"], p["conv3a_b"])
    x = maxpool2x2(conv_mfm(x, p["conv3_w"], p["conv3_b"]))
    x = conv_mfm(x, p["conv4a_w"], p["conv4a_b"])
    x = maxpool2x2(conv_mfm(x, p["conv4_w"], p["conv4_b"]))
    x = conv_mfm(x, p["conv5a_w"], p["conv5a_b"])
    x = maxpool2x2(conv_mfm(x, p["conv5_w"], p["conv5_b"]))

    # flatten in NCHW order to match torch's x.view(N, -1)
    n = x.shape[0]
    x = jnp.transpose(x, (0, 3, 1, 2)).reshape(n, -1)            # (N, 1512)

    # TODO(synk): dropout(p=0.7) -> identity (eval mode).
    return fc_head(x, p["fc1_w"], p["fc1_b"], p["fc2_w"], p["fc2_b"])


# ----------------------------------------------------------------------------
# Small-shape correctness checks of every kernel against plain-JAX references
# ----------------------------------------------------------------------------
def _selfcheck():
    key = jax.random.PRNGKey(42)

    # conv+MFM: cin==1 VPU path, tiled+halo path, 1x1 path, ragged row tiles.
    for (cin, o, k, hw, row_tile) in [
        (1, 8, 3, (12, 10), 4),      # cin==1, row-tiled with shifted views
        (5, 12, 3, (11, 9), None),   # whole-image block, in-block halo
        (4, 6, 1, (9, 7), 4),        # 1x1 conv, row-tiled, ragged last tile
    ]:
        key, k1, k2, k3 = jax.random.split(key, 4)
        x = jax.random.normal(k1, (2, hw[0], hw[1], cin), jnp.float32)
        w = jax.random.normal(k2, (o, cin, k, k), jnp.float32) * 0.3
        b = jax.random.normal(k3, (o,), jnp.float32)
        wp, bp = _convert_conv(w, b)
        got = conv_mfm(x, wp, bp, row_tile=row_tile)
        ref = jax.lax.conv_general_dilated(
            x, jnp.transpose(w, (2, 3, 1, 0)), (1, 1), "VALID",
            dimension_numbers=("NHWC", "HWIO", "NHWC")) + b.reshape(1, 1, 1, -1)
        ref = jnp.maximum(ref[..., 0::2], ref[..., 1::2])
        assert jnp.allclose(got, ref, atol=1e-4, rtol=1e-4), "conv_mfm mismatch"

    # maxpool 2x2 with a ragged row tile
    key, k1 = jax.random.split(key)
    x = jax.random.normal(k1, (2, 6, 8, 5), jnp.float32)
    got = maxpool2x2(x, row_tile=2)
    ref = jax.lax.reduce_window(x, -jnp.inf, jax.lax.max,
                                (1, 2, 2, 1), (1, 2, 2, 1), "VALID")
    assert jnp.allclose(got, ref, atol=1e-5), "maxpool2x2 mismatch"

    # fused fc head
    key, k1, k2, k3, k4, k5 = jax.random.split(key, 6)
    x = jax.random.normal(k1, (2, 24), jnp.float32)
    w1 = jax.random.normal(k2, (24, 16), jnp.float32) * 0.2
    b1 = jax.random.normal(k3, (1, 16), jnp.float32)
    w2 = jax.random.normal(k4, (16, 2), jnp.float32) * 0.2
    b2 = jax.random.normal(k5, (1, 2), jnp.float32)
    got = fc_head(x, w1, b1, w2, b2)
    ref = jax.nn.log_softmax(jnp.maximum(x @ w1 + b1, 0.0) @ w2 + b2, axis=-1)
    assert jnp.allclose(got, ref, atol=1e-4, rtol=1e-4), "fc_head mismatch"


# ----------------------------------------------------------------------------
if __name__ == "__main__":
    _selfcheck()

    key = jax.random.PRNGKey(0)
    pkey, xkey = jax.random.split(key)
    params = prepare_params(init_params(pkey))
    # Smallest spatial size compatible with fc1's 1512 input features:
    # (766, 382) -> final feature map (8, 21, 9); 8*21*9 = 1512.
    x = jax.random.normal(xkey, (2, 1, 766, 382), jnp.float32)   # NCHW like torch

    out = jax.block_until_ready(jax.jit(net_forward)(x, params))
    assert out.shape == (2, 2), out.shape
    assert bool(jnp.all(jnp.isfinite(out)))
    assert jnp.allclose(jnp.sum(jnp.exp(out), axis=1), 1.0, atol=1e-4)
    print("KERNEL_OK")
</pallas_src>

<mosaic_0001>
module attributes {stable_mosaic.version = 11 : i64} {
  func.func @_conv_mfm_kernel(%arg0: i32, %arg1: i32, %arg2: memref<1x4x10x1xf32, #tpu.memory_space<vmem>>, %arg3: memref<1x4x10x1xf32, #tpu.memory_space<vmem>>, %arg4: memref<1x4x10x1xf32, #tpu.memory_space<vmem>>, %arg5: memref<3x3x1x8xf32, #tpu.memory_space<vmem>>, %arg6: memref<1x8xf32, #tpu.memory_space<vmem>>, %arg7: memref<1x4x8x4xf32, #tpu.memory_space<vmem>>) attributes {dimension_semantics = [#tpu.dimension_semantics<parallel>, #tpu.dimension_semantics<parallel>], iteration_bounds = array<i64: 2, 3>, scalar_prefetch = 0 : i64, scratch_operands = 0 : i64, tpu.core_type = #tpu.core_type<tc>, window_params = [{transform_indices = @transform_0, window_bounds = array<i64: 1, 4, 10, 1>}, {transform_indices = @transform_1, window_bounds = array<i64: 1, 4, 10, 1>}, {transform_indices = @transform_2, window_bounds = array<i64: 1, 4, 10, 1>}, {pipeline_mode = #tpu.pipeline_mode<synchronous>, transform_indices = @transform_3, window_bounds = array<i64: 3, 3, 1, 8>}, {pipeline_mode = #tpu.pipeline_mode<synchronous>, transform_indices = @transform_4, window_bounds = array<i64: 1, 8>}, {transform_indices = @transform_5, window_bounds = array<i64: 1, 4, 8, 4>}]} {
    %cst = arith.constant 0.000000e+00 : f32
    %0 = vector.broadcast %cst : f32 to vector<32x8xf32>
    %c0 = arith.constant 0 : index
    %c0_0 = arith.constant 0 : index
    %c0_1 = arith.constant 0 : index
    %c0_2 = arith.constant 0 : index
    %1 = vector.load %arg2[%c0, %c0_0, %c0_1, %c0_2] : memref<1x4x10x1xf32, #tpu.memory_space<vmem>>, vector<1x4x8x1xf32>
    %2 = vector.shape_cast %1 : vector<1x4x8x1xf32> to vector<4x8x1xf32>
    %3 = vector.shape_cast %2 : vector<4x8x1xf32> to vector<32x1xf32>
    %c0_3 = arith.constant 0 : index
    %c0_4 = arith.constant 0 : index
    %c0_5 = arith.constant 0 : index
    %c0_6 = arith.constant 0 : index
    %4 = vector.load %arg5[%c0_3, %c0_4, %c0_5, %c0_6] : memref<3x3x1x8xf32, #tpu.memory_space<vmem>>, vector<1x1x1x8xf32>
    %5 = vector.shape_cast %4 : vector<1x1x1x8xf32> to vector<1x8xf32>
    %6 = vector.broadcast %3 : vector<32x1xf32> to vector<32x8xf32>
    %7 = vector.broadcast %5 : vector<1x8xf32> to vector<32x8xf32>
    %8 = arith.mulf %6, %7 : vector<32x8xf32>
    %9 = arith.addf %0, %8 : vector<32x8xf32>
    %c0_7 = arith.constant 0 : index
    %c0_8 = arith.constant 0 : index
    %c1 = arith.constant 1 : index
    %c0_9 = arith.constant 0 : index
    %10 = vector.load %arg2[%c0_7, %c0_8, %c1, %c0_9] : memref<1x4x10x1xf32, #tpu.memory_space<vmem>>, vector<1x4x8x1xf32>
    %11 = vector.shape_cast %10 : vector<1x4x8x1xf32> to vector<4x8x1xf32>
    %12 = vector.shape_cast %11 : vector<4x8x1xf32> to vector<32x1xf32>
    %c0_10 = arith.constant 0 : index
    %c1_11 = arith.constant 1 : index
    %c0_12 = arith.constant 0 : index
    %c0_13 = arith.constant 0 : index
    %13 = vector.load %arg5[%c0_10, %c1_11, %c0_12, %c0_13] : memref<3x3x1x8xf32, #tpu.memory_space<vmem>>, vector<1x1x1x8xf32>
    %14 = vector.shape_cast %13 : vector<1x1x1x8xf32> to vector<1x8xf32>
    %15 = vector.broadcast %12 : vector<32x1xf32> to vector<32x8xf32>
    %16 = vector.broadcast %14 : vector<1x8xf32> to vector<32x8xf32>
    %17 = arith.mulf %15, %16 : vector<32x8xf32>
    %18 = arith.addf %9, %17 : vector<32x8xf32>
    %c0_14 = arith.constant 0 : index
    %c0_15 = arith.constant 0 : index
    %c2 = arith.constant 2 : index
    %c0_16 = arith.constant 0 : index
    %19 = vector.load %arg2[%c0_14, %c0_15, %c2, %c0_16] : memref<1x4x10x1xf32, #tpu.memory_space<vmem>>, vector<1x4x8x1xf32>
    %20 = vector.shape_cast %19 : vector<1x4x8x1xf32> to vector<4x8x1xf32>
    %21 = vector.shape_cast %20 : vector<4x8x1xf32> to vector<32x1xf32>
    %c0_17 = arith.constant 0 : index
    %c2_18 = arith.constant 2 : index
    %c0_19 = arith.constant 0 : index
    %c0_20 = arith.constant 0 : index
    %22 = vector.load %arg5[%c0_17, %c2_18, %c0_19, %c0_20] : memref<3x3x1x8xf32, #tpu.memory_space<vmem>>, vector<1x1x1x8xf32>
    %23 = vector.shape_cast %22 : vector<1x1x1x8xf32> to vector<1x8xf32>
    %24 = vector.broadcast %21 : vector<32x1xf32> to vector<32x8xf32>
    %25 = vector.broadcast %23 : vector<1x8xf32> to vector<32x8xf32>
    %26 = arith.mulf %24, %25 : vector<32x8xf32>
    %27 = arith.addf %18, %26 : vector<32x8xf32>
    %c0_21 = arith.constant 0 : index
    %c0_22 = arith.constant 0 : index
    %c0_23 = arith.constant 0 : index
    %c0_24 = arith.constant 0 : index
    %28 = vector.load %arg3[%c0_21, %c0_22, %c0_23, %c0_24] : memref<1x4x10x1xf32, #tpu.memory_space<vmem>>, vector<1x4x8x1xf32>
    %29 = vector.shape_cast %28 : vector<1x4x8x1xf32> to vector<4x8x1xf32>
    %30 = vector.shape_cast %29 : vector<4x8x1xf32> to vector<32x1xf32>
    %c1_25 = arith.constant 1 : index
    %c0_26 = arith.constant 0 : index
    %c0_27 = arith.constant 0 : index
    %c0_28 = arith.constant 0 : index
    %31 = vector.load %arg5[%c1_25, %c0_26, %c0_27, %c0_28] : memref<3x3x1x8xf32, #tpu.memory_space<vmem>>, vector<1x1x1x8xf32>
    %32 = vector.shape_cast %31 : vector<1x1x1x8xf32> to vector<1x8xf32>
    %33 = vector.broadcast %30 : vector<32x1xf32> to vector<32x8xf32>
    %34 = vector.broadcast %32 : vector<1x8xf32> to vector<32x8xf32>
    %35 = arith.mulf %33, %34 : vector<32x8xf32>
    %36 = arith.addf %27, %35 : vector<32x8xf32>
    %c0_29 = arith.constant 0 : index
    %c0_30 = arith.constant 0 : index
    %c1_31 = arith.constant 1 : index
    %c0_32 = arith.constant 0 : index
    %37 = vector.load %arg3[%c0_29, %c0_30, %c1_31, %c0_32] : memref<1x4x10x1xf32, #tpu.memory_space<vmem>>, vector<1x4x8x1xf32>
    %38 = vector.shape_cast %37 : vector<1x4x8x1xf32> to vector<4x8x1xf32>
    %39 = vector.shape_cast %38 : vector<4x8x1xf32> to vector<32x1xf32>
    %c1_33 = arith.constant 1 : index
    %c1_34 = arith.constant 1 : index
    %c0_35 = arith.constant 0 : index
    %c0_36 = arith.constant 0 : index
    %40 = vector.load %arg5[%c1_33, %c1_34, %c0_35, %c0_36] : memref<3x3x1x8xf32, #tpu.memory_space<vmem>>, vector<1x1x1x8xf32>
    %41 = vector.shape_cast %40 : vector<1x1x1x8xf32> to vector<1x8xf32>
    %42 = vector.broadcast %39 : vector<32x1xf32> to vector<32x8xf32>
    %43 = vector.broadcast %41 : vector<1x8xf32> to vector<32x8xf32>
    %44 = arith.mulf %42, %43 : vector<32x8xf32>
    %45 = arith.addf %36, %44 : vector<32x8xf32>
    %c0_37 = arith.constant 0 : index
    %c0_38 = arith.constant 0 : index
    %c2_39 = arith.constant 2 : index
    %c0_40 = arith.constant 0 : index
    %46 = vector.load %arg3[%c0_37, %c0_38, %c2_39, %c0_40] : memref<1x4x10x1xf32, #tpu.memory_space<vmem>>, vector<1x4x8x1xf32>
    %47 = vector.shape_cast %46 : vector<1x4x8x1xf32> to vector<4x8x1xf32>
    %48 = vector.shape_cast %47 : vector<4x8x1xf32> to vector<32x1xf32>
    %c1_41 = arith.constant 1 : index
    %c2_42 = arith.constant 2 : index
    %c0_43 = arith.constant 0 : index
    %c0_44 = arith.constant 0 : index
    %49 = vector.load %arg5[%c1_41, %c2_42, %c0_43, %c0_44] : memref<3x3x1x8xf32, #tpu.memory_space<vmem>>, vector<1x1x1x8xf32>
    %50 = vector.shape_cast %49 : vector<1x1x1x8xf32> to vector<1x8xf32>
    %51 = vector.broadcast %48 : vector<32x1xf32> to vector<32x8xf32>
    %52 = vector.broadcast %50 : vector<1x8xf32> to vector<32x8xf32>
    %53 = arith.mulf %51, %52 : vector<32x8xf32>
    %54 = arith.addf %45, %53 : vector<32x8xf32>
    %c0_45 = arith.constant 0 : index
    %c0_46 = arith.constant 0 : index
    %c0_47 = arith.constant 0 : index
    %c0_48 = arith.constant 0 : index
    %55 = vector.load %arg4[%c0_45, %c0_46, %c0_47, %c0_48] : memref<1x4x10x1xf32, #tpu.memory_space<vmem>>, vector<1x4x8x1xf32>
    %56 = vector.shape_cast %55 : vector<1x4x8x1xf32> to vector<4x8x1xf32>
    %57 = vector.shape_cast %56 : vector<4x8x1xf32> to vector<32x1xf32>
    %c2_49 = arith.constant 2 : index
    %c0_50 = arith.constant 0 : index
    %c0_51 = arith.constant 0 : index
    %c0_52 = arith.constant 0 : index
    %58 = vector.load %arg5[%c2_49, %c0_50, %c0_51, %c0_52] : memref<3x3x1x8xf32, #tpu.memory_space<vmem>>, vector<1x1x1x8xf32>
    %59 = vector.shape_cast %58 : vector<1x1x1x8xf32> to vector<1x8xf32>
    %60 = vector.broadcast %57 : vector<32x1xf32> to vector<32x8xf32>
    %61 = vector.broadcast %59 : vector<1x8xf32> to vector<32x8xf32>
    %62 = arith.mulf %60, %61 : vector<32x8xf32>
    %63 = arith.addf %54, %62 : vector<32x8xf32>
    %c0_53 = arith.constant 0 : index
    %c0_54 = arith.constant 0 : index
    %c1_55 = arith.constant 1 : index
    %c0_56 = arith.constant 0 : index
    %64 = vector.load %arg4[%c0_53, %c0_54, %c1_55, %c0_56] : memref<1x4x10x1xf32, #tpu.memory_space<vmem>>, vector<1x4x8x1xf32>
    %65 = vector.shape_cast %64 : vector<1x4x8x1xf32> to vector<4x8x1xf32>
    %66 = vector.shape_cast %65 : vector<4x8x1xf32> to vector<32x1xf32>
    %c2_57 = arith.constant 2 : index
    %c1_58 = arith.constant 1 : index
    %c0_59 = arith.constant 0 : index
    %c0_60 = arith.constant 0 : index
    %67 = vector.load %arg5[%c2_57, %c1_58, %c0_59, %c0_60] : memref<3x3x1x8xf32, #tpu.memory_space<vmem>>, vector<1x1x1x8xf32>
    %68 = vector.shape_cast %67 : vector<1x1x1x8xf32> to vector<1x8xf32>
    %69 = vector.broadcast %66 : vector<32x1xf32> to vector<32x8xf32>
    %70 = vector.broadcast %68 : vector<1x8xf32> to vector<32x8xf32>
    %71 = arith.mulf %69, %70 : vector<32x8xf32>
    %72 = arith.addf %63, %71 : vector<32x8xf32>
    %c0_61 = arith.constant 0 : index
    %c0_62 = arith.constant 0 : index
    %c2_63 = arith.constant 2 : index
    %c0_64 = arith.constant 0 : index
    %73 = vector.load %arg4[%c0_61, %c0_62, %c2_63, %c0_64] : memref<1x4x10x1xf32, #tpu.memory_space<vmem>>, vector<1x4x8x1xf32>
    %74 = vector.shape_cast %73 : vector<1x4x8x1xf32> to vector<4x8x1xf32>
    %75 = vector.shape_cast %74 : vector<4x8x1xf32> to vector<32x1xf32>
    %c2_65 = arith.constant 2 : index
    %c2_66 = arith.constant 2 : index
    %c0_67 = arith.constant 0 : index
    %c0_68 = arith.constant 0 : index
    %76 = vector.load %arg5[%c2_65, %c2_66, %c0_67, %c0_68] : memref<3x3x1x8xf32, #tpu.memory_space<vmem>>, vector<1x1x1x8xf32>
    %77 = vector.shape_cast %76 : vector<1x1x1x8xf32> to vector<1x8xf32>
    %78 = vector.broadcast %75 : vector<32x1xf32> to vector<32x8xf32>
    %79 = vector.broadcast %77 : vector<1x8xf32> to vector<32x8xf32>
    %80 = arith.mulf %78, %79 : vector<32x8xf32>
    %81 = arith.addf %72, %80 : vector<32x8xf32>
    %c0_69 = arith.constant 0 : index
    %c0_70 = arith.constant 0 : index
    %82 = vector.load %arg6[%c0_69, %c0_70] : memref<1x8xf32, #tpu.memory_space<vmem>>, vector<1x8xf32>
    %83 = vector.broadcast %82 : vector<1x8xf32> to vector<32x8xf32>
    %84 = arith.addf %81, %83 : vector<32x8xf32>
    %85 = vector.extract_strided_slice %84 {offsets = [0, 0], sizes = [32, 4], strides = [1, 1]} : vector<32x8xf32> to vector<32x4xf32>
    %86 = vector.extract_strided_slice %84 {offsets = [0, 4], sizes = [32, 4], strides = [1, 1]} : vector<32x8xf32> to vector<32x4xf32>
    %87 = arith.maximumf %85, %86 : vector<32x4xf32>
    %88 = vector.shape_cast %87 : vector<32x4xf32> to vector<4x8x4xf32>
    %c0_71 = arith.constant 0 : index
    %c0_72 = arith.constant 0 : index
    %c0_73 = arith.constant 0 : index
    %c0_74 = arith.constant 0 : index
    %89 = vector.load %arg7[%c0_71, %c0_72, %c0_73, %c0_74] : memref<1x4x8x4xf32, #tpu.memory_space<vmem>>, vector<1x4x8x4xf32>
    %90 = vector.shape_cast %89 : vector<1x4x8x4xf32> to vector<4x8x4xf32>
    %91 = vector.shape_cast %88 : vector<4x8x4xf32> to vector<1x4x8x4xf32>
    tpu.vector_store %arg7[%c0_71, %c0_72, %c0_73, %c0_74], %91 {strides = array<i32>} : memref<1x4x8x4xf32, #tpu.memory_space<vmem>>, vector<1x4x8x4xf32>,
    return
  }
  func.func @transform_0(%arg0: i32, %arg1: i32) -> (i32, i32, i32, i32) {
    %c0_i32 = arith.constant 0 : i32
    %c0_i32_0 = arith.constant 0 : i32
    %c0_i32_1 = arith.constant 0 : i32
    return %arg0, %arg1, %c0_i32, %c0_i32_0 : i32, i32, i32, i32
  }
  func.func @transform_1(%arg0: i32, %arg1: i32) -> (i32, i32, i32, i32) {
    %c0_i32 = arith.constant 0 : i32
    %c0_i32_0 = arith.constant 0 : i32
    %c0_i32_1 = arith.constant 0 : i32
    return %arg0, %arg1, %c0_i32, %c0_i32_0 : i32, i32, i32, i32
  }
  func.func @transform_2(%arg0: i32, %arg1: i32) -> (i32, i32, i32, i32) {
    %c0_i32 = arith.constant 0 : i32
    %c0_i32_0 = arith.constant 0 : i32
    %c0_i32_1 = arith.constant 0 : i32
    return %arg0, %arg1, %c0_i32, %c0_i32_0 : i32, i32, i32, i32
  }
  func.func @transform_3(%arg0: i32, %arg1: i32) -> (i32, i32, i32, i32) {
    %c0_i32 = arith.constant 0 : i32
    %c0_i32_0 = arith.constant 0 : i32
    %c0_i32_1 = arith.constant 0 : i32
    %c0_i32_2 = arith.constant 0 : i32
    %c0_i32_3 = arith.constant 0 : i32
    return %c0_i32, %c0_i32_0, %c0_i32_1, %c0_i32_2 : i32, i32, i32, i32
  }
  func.func @transform_4(%arg0: i32, %arg1: i32) -> (i32, i32) {
    %c0_i32 = arith.constant 0 : i32
    %c0_i32_0 = arith.constant 0 : i32
    %c0_i32_1 = arith.constant 0 : i32
    return %c0_i32, %c0_i32_0 : i32, i32
  }
  func.func @transform_5(%arg0: i32, %arg1: i32) -> (i32, i32, i32, i32) {
    %c0_i32 = arith.constant 0 : i32
    %c0_i32_0 = arith.constant 0 : i32
    %c0_i32_1 = arith.constant 0 : i32
    return %arg0, %arg1, %c0_i32, %c0_i32_0 : i32, i32, i32, i32
  }
}

</mosaic_0001>

<llo_original>
// kernel: tpu_custom_call.1
$region0: #{tpu_custom_call.1}
  #allocation0 [shape = 'u32[]', space=smem, size = 0x4, offset = 0x4, fixed_abs, tag = 'smem constant byte address 0x4 - core index']
  #allocation1 [shape = 'u32[144,128]{1,0:T(1,128)}', space=vmem, size = 0x12000, scoped, tag = 'internal scratch']
  %s0 = inlined_call_operand.vmem [shape: f32[2,10,10,1], index: 0, kind: input, shape index: {}]
  %s1 = inlined_call_operand.vmem [shape: f32[2,10,10,1], index: 1, kind: input, shape index: {}]
  %s2 = inlined_call_operand.vmem [shape: f32[2,10,10,1], index: 2, kind: input, shape index: {}]
  %s3 = inlined_call_operand.vmem [shape: f32[3,3,1,8], index: 3, kind: input, shape index: {}]
  %s4 = inlined_call_operand.vmem [shape: f32[1,8], index: 4, kind: input, shape index: {}]
  %s5 = inlined_call_operand.vmem [shape: f32[2,10,8,4], index: 5, kind: output, shape index: {}]
  %s6 = sld [smem:[#allocation0]]
  $region101: #{tpu_custom_call.1} parent=0
    _
  %s8 = ssub.s32 1, %s6
  %s9 = scalar_select 0, %s8, %s6
  $region1: #{tpu_custom_call.1} parent=0
    #allocation2 [shape = 'u8[32768]{0}', space=vmem, size = 0x8000, scoped, tag = 'output window, operand 0']
    loop: start=0, step=1, limit=8
    $region2: #{tpu_custom_call.1} parent=1 // loop_pre_header
      _
    $region3: #{tpu_custom_call.1} parent=1 // loop_header
      %s11 = sphi 0, %s15
      %p12 = scmp.ge.s32.totalorder %s11, 8
      %s18 = sphi 0, %s30
      %s19 = sphi 0, %s26
      %s20 = sphi 0, %s18
      %s21 = sphi 0, %s19
      %s22 = sphi 0, %s20
      %s23 = sphi 0, %s21
      %s35 = sphi 0, %s37
      %s38 = sphi 0, %s35
      %s39 = sphi 0, %s38
      %s55 = sphi 0, %s39
      %s63 = sphi 0, %s65
      %s66 = sphi 0, %s63
      %s67 = sphi 0, %s66
      %s83 = sphi 0, %s67
      %s91 = sphi 0, %s93
      %s94 = sphi 0, %s91
      %s95 = sphi 0, %s94
      %s111 = sphi 0, %s95
      %s115 = sphi 0, %s115
      %s117 = sphi 0, %s115
      %s118 = sphi 0, %s117
      %s132 = sphi 0, %s118
      %s136 = sphi 0, %s136
      %s138 = sphi 0, %s136
      %s139 = sphi 0, %s138
      %s153 = sphi 0, %s139
      %s161 = sphi 0, %s163
      %s164 = sphi 0, %s161
      %s165 = sphi 0, %s164
      %s181 = sphi 0, %s165
    $region4: #{tpu_custom_call.1} parent=1 // loop_header_branch
      %14 = sbr.rel (%p12) target = $region8
    $region5: #{tpu_custom_call.1} parent=1 // loop_body
      %s16 = ssub.s32 %s11, 1
      %s17 = ssub.s32 %s11, 2
      %s24 = sadd.s32 1, %s19
      %p25 = scmp.ge.s32.totalorder %s24, 3
      %s26 = scalar_select %p25, 0, %s24
      %s27 = sadd.s32 1, %s18
      %s28 = scalar_select %p25, %s27, %s18
      %p29 = scmp.ge.s32.totalorder %s28, 2
      %s30 = scalar_select %p29, 0, %s28
      %s31 = ssub.s32 %s18, %s30
      %s32 = ssub.s32 %s19, %s26
      %s33 = sor.u32 %s31, %s32
      %p34 = scmp.eq.s32.totalorder %s33, 0
      %s36 = sadd.s32 %s35, 1
      %s37 = scalar_select %p34, %s35, %s36
      %p40 = pneg %p34
      %p41 = scmp.eq.s32.totalorder %s11, 5
      %p42 = por %p40, %p41
      %p43 = scmp.ne.s32.totalorder %s35, %s38
      %p44 = scmp.eq.s32.totalorder %s11, 0
      %p45 = por %p43, %p44
      %p46 = scmp.ne.s32.totalorder %s35, %s38
      %p47 = scmp.eq.s32.totalorder %s16, 5
      %p48 = por %p46, %p47
      %p49 = scmp.ne.s32.totalorder %s38, %s39
      %p50 = scmp.eq.s32.totalorder %s16, 0
      %p51 = por %p49, %p50
      %p52 = scmp.ne.s32.totalorder %s38, %s39
      %p53 = scmp.eq.s32.totalorder %s17, 5
      %p54 = por %p52, %p53
      %p56 = scmp.ne.s32.totalorder %s39, %s55
      %p57 = scmp.eq.s32.totalorder %s17, 0
      %p58 = por %p56, %p57
      %s59 = ssub.s32 %s18, %s30
      %s60 = ssub.s32 %s19, %s26
      %s61 = sor.u32 %s59, %s60
      %p62 = scmp.eq.s32.totalorder %s61, 0
      %s64 = sadd.s32 %s63, 1
      %s65 = scalar_select %p62, %s63, %s64
      %p68 = pneg %p62
      %p69 = scmp.eq.s32.totalorder %s11, 5
      %p70 = por %p68, %p69
      %p71 = scmp.ne.s32.totalorder %s63, %s66
      %p72 = scmp.eq.s32.totalorder %s11, 0
      %p73 = por %p71, %p72
      %p74 = scmp.ne.s32.totalorder %s63, %s66
      %p75 = scmp.eq.s32.totalorder %s16, 5
      %p76 = por %p74, %p75
      %p77 = scmp.ne.s32.totalorder %s66, %s67
      %p78 = scmp.eq.s32.totalorder %s16, 0
      %p79 = por %p77, %p78
      %p80 = scmp.ne.s32.totalorder %s66, %s67
      %p81 = scmp.eq.s32.totalorder %s17, 5
      %p82 = por %p80, %p81
      %p84 = scmp.ne.s32.totalorder %s67, %s83
      %p85 = scmp.eq.s32.totalorder %s17, 0
      %p86 = por %p84, %p85
      %s87 = ssub.s32 %s18, %s30
      %s88 = ssub.s32 %s19, %s26
      %s89 = sor.u32 %s87, %s88
      %p90 = scmp.eq.s32.totalorder %s89, 0
      %s92 = sadd.s32 %s91, 1
      %s93 = scalar_select %p90, %s91, %s92
      %p96 = pneg %p90
      %p97 = scmp.eq.s32.totalorder %s11, 5
      %p98 = por %p96, %p97
      %p99 = scmp.ne.s32.totalorder %s91, %s94
      %p100 = scmp.eq.s32.totalorder %s11, 0
      %p101 = por %p99, %p100
      %p102 = scmp.ne.s32.totalorder %s91, %s94
      %p103 = scmp.eq.s32.totalorder %s16, 5
      %p104 = por %p102, %p103
      %p105 = scmp.ne.s32.totalorder %s94, %s95
      %p106 = scmp.eq.s32.totalorder %s16, 0
      %p107 = por %p105, %p106
      %p108 = scmp.ne.s32.totalorder %s94, %s95
      %p109 = scmp.eq.s32.totalorder %s17, 5
      %p110 = por %p108, %p109
      %p112 = scmp.ne.s32.totalorder %s95, %s111
      %p113 = scmp.eq.s32.totalorder %s17, 0
      %p114 = por %p112, %p113
      %s116 = sadd.s32 %s115, 1
      %p119 = scmp.eq.s32.totalorder %s11, 5
      %p120 = scmp.ne.s32.totalorder %s115, %s117
      %p121 = scmp.eq.s32.totalorder %s11, 0
      %p122 = por %p120, %p121
      %p123 = scmp.ne.s32.totalorder %s115, %s117
      %p124 = scmp.eq.s32.totalorder %s16, 5
      %p125 = por %p123, %p124
      %p126 = scmp.ne.s32.totalorder %s117, %s118
      %p127 = scmp.eq.s32.totalorder %s16, 0
      %p128 = por %p126, %p127
      %p129 = scmp.ne.s32.totalorder %s117, %s118
      %p130 = scmp.eq.s32.totalorder %s17, 5
      %p131 = por %p129, %p130
      %p133 = scmp.ne.s32.totalorder %s118, %s132
      %p134 = scmp.eq.s32.totalorder %s17, 0
      %p135 = por %p133, %p134
      %s137 = sadd.s32 %s136, 1
      %p140 = scmp.eq.s32.totalorder %s11, 5
      %p141 = scmp.ne.s32.totalorder %s136, %s138
      %p142 = scmp.eq.s32.totalorder %s11, 0
      %p143 = por %p141, %p142
      %p144 = scmp.ne.s32.totalorder %s136, %s138
      %p145 = scmp.eq.s32.totalorder %s16, 5
      %p146 = por %p144, %p145
      %p147 = scmp.ne.s32.totalorder %s138, %s139
      %p148 = scmp.eq.s32.totalorder %s16, 0
      %p149 = por %p147, %p148
      %p150 = scmp.ne.s32.totalorder %s138, %s139
      %p151 = scmp.eq.s32.totalorder %s17, 5
      %p152 = por %p150, %p151
      %p154 = scmp.ne.s32.totalorder %s139, %s153
      %p155 = scmp.eq.s32.totalorder %s17, 0
      %p156 = por %p154, %p155
      %s157 = ssub.s32 %s18, %s30
      %s158 = ssub.s32 %s19, %s26
      %s159 = sor.u32 %s157, %s158
      %p160 = scmp.eq.s32.totalorder %s159, 0
      %s162 = sadd.s32 %s161, 1
      %s163 = scalar_select %p160, %s161, %s162
      %p166 = pneg %p160
      %p167 = scmp.eq.s32.totalorder %s11, 5
      %p168 = por %p166, %p167
      %p169 = scmp.ne.s32.totalorder %s161, %s164
      %p170 = scmp.eq.s32.totalorder %s11, 0
      %p171 = por %p169, %p170
      %p172 = scmp.ne.s32.totalorder %s161, %s164
      %p173 = scmp.eq.s32.totalorder %s16, 5
      %p174 = por %p172, %p173
      %p175 = scmp.ne.s32.totalorder %s164, %s165
      %p176 = scmp.eq.s32.totalorder %s16, 0
      %p177 = por %p175, %p176
      %p178 = scmp.ne.s32.totalorder %s164, %s165
      %p179 = scmp.eq.s32.totalorder %s17, 5
      %p180 = por %p178, %p179
      %p182 = scmp.ne.s32.totalorder %s165, %s181
      %p183 = scmp.eq.s32.totalorder %s17, 0
      %p184 = por %p182, %p183
      %p185 = scmp.le.s32.totalorder 1, %s11
      %p186 = scmp.lt.s32.totalorder %s11, 7
      %p187 = pnand %p185, %p186
      %p188 = pneg %p187
      // Predicated region
      $region9: #{tpu_custom_call.1} parent=5 // pred_check
        _
      $region10: #{tpu_custom_call.1} parent=5 // pred_check_branch
        %190 = sbr.rel (%p187) target = $region12
      $region11: #{tpu_custom_call.1} parent=5 // pred_region
        %s191 = ssub.s32 %s11, 1
        // Predicated region
        $region13: #{tpu_custom_call.1} parent=11 // pred_check
          %p192 = pneg %p128
        $region14: #{tpu_custom_call.1} parent=11 // pred_check_branch
          %194 = sbr.rel (%p192) target = $region16
        $region15: #{tpu_custom_call.1} parent=11 // pred_region
          _
        $region16: #{tpu_custom_call.1} parent=11 // pred_fallthru
          _
        // Predicated region
        $region17: #{tpu_custom_call.1} parent=11 // pred_check
          %p195 = pneg %p149
        $region18: #{tpu_custom_call.1} parent=11 // pred_check_branch
          %197 = sbr.rel (%p195) target = $region20
        $region19: #{tpu_custom_call.1} parent=11 // pred_region
          _
        $region20: #{tpu_custom_call.1} parent=11 // pred_fallthru
          _
      $region12: #{tpu_custom_call.1} parent=5 // pred_fallthru
        _
      %p198 = scmp.lt.s32.totalorder %s11, 6
      // Predicated region
      $region21: #{tpu_custom_call.1} parent=5 // pred_check
        %p199 = pneg %p198
      $region22: #{tpu_custom_call.1} parent=5 // pred_check_branch
        %201 = sbr.rel (%p199) target = $region24
      $region23: #{tpu_custom_call.1} parent=5 // pred_region
        // Predicated region
        $region25: #{tpu_custom_call.1} parent=23 // pred_check
          %p202 = pneg %p45
        $region26: #{tpu_custom_call.1} parent=23 // pred_check_branch
          %204 = sbr.rel (%p202) target = $region28
        $region27: #{tpu_custom_call.1} parent=23 // pred_region
          %s205 = smul.u32 4, %s19
          %s206 = ssub.s32 10, %s205
          %p207 = scmp.lt.s32.totalorder %s206, 4
          %s208 = scalar_select %p207, %s206, 4
          %s209 = smul.u32 128, %s208
          %s210 = smul.u32 %s209, 2
          %p211 = scmp.lt.s32.totalorder %s18, 1
          %s212 = scalar_select %p211, %s18, 1
          %p213 = scmp.lt.s32.totalorder %s205, 9
          %s214 = scalar_select %p213, %s205, 9
          %s215 = smul.addr %s214, 2
          %s216 = smul.addr %s212, 20
          %s217 = sadd.s32 %s215, %s216
          %s218 = smul.addr %s217, 8
          %s219 = scalar_lea.vmem %s0, %s218
          %s220 = smul.u32 4, %s19
          %s221 = ssub.s32 10, %s220
          %p222 = scmp.lt.s32.totalorder %s221, 4
          %s223 = scalar_select %p222, %s221, 4
          %s224 = smul.u32 128, %s223
          %s225 = smul.u32 %s224, 2
        $region28: #{tpu_custom_call.1} parent=23 // pred_fallthru
          _
        // Predicated region
        $region29: #{tpu_custom_call.1} parent=23 // pred_check
          %p226 = pneg %p73
        $region30: #{tpu_custom_call.1} parent=23 // pred_check_branch
          %228 = sbr.rel (%p226) target = $region32
        $region31: #{tpu_custom_call.1} parent=23 // pred_region
          %s229 = smul.u32 4, %s19
          %s230 = ssub.s32 10, %s229
          %p231 = scmp.lt.s32.totalorder %s230, 4
          %s232 = scalar_select %p231, %s230, 4
          %s233 = smul.u32 128, %s232
          %s234 = smul.u32 %s233, 2
          %p235 = scmp.lt.s32.totalorder %s18, 1
          %s236 = scalar_select %p235, %s18, 1
          %p237 = scmp.lt.s32.totalorder %s229, 9
          %s238 = scalar_select %p237, %s229, 9
          %s239 = smul.addr %s238, 2
          %s240 = smul.addr %s236, 20
          %s241 = sadd.s32 %s239, %s240
          %s242 = smul.addr %s241, 8
          %s243 = scalar_lea.vmem %s1, %s242
          %s244 = smul.u32 4, %s19
          %s245 = ssub.s32 10, %s244
          %p246 = scmp.lt.s32.totalorder %s245, 4
          %s247 = scalar_select %p246, %s245, 4
          %s248 = smul.u32 128, %s247
          %s249 = smul.u32 %s248, 2
        $region32: #{tpu_custom_call.1} parent=23 // pred_fallthru
          _
        // Predicated region
        $region33: #{tpu_custom_call.1} parent=23 // pred_check
          %p250 = pneg %p101
        $region34: #{tpu_custom_call.1} parent=23 // pred_check_branch
          %252 = sbr.rel (%p250) target = $region36
        $region35: #{tpu_custom_call.1} parent=23 // pred_region
          %s253 = smul.u32 4, %s19
          %s254 = ssub.s32 10, %s253
          %p255 = scmp.lt.s32.totalorder %s254, 4
          %s256 = scalar_select %p255, %s254, 4
          %s257 = smul.u32 128, %s256
          %s258 = smul.u32 %s257, 2
          %p259 = scmp.lt.s32.totalorder %s18, 1
          %s260 = scalar_select %p259, %s18, 1
          %p261 = scmp.lt.s32.totalorder %s253, 9
          %s262 = scalar_select %p261, %s253, 9
          %s263 = smul.addr %s262, 2
          %s264 = smul.addr %s260, 20
          %s265 = sadd.s32 %s263, %s264
          %s266 = smul.addr %s265, 8
          %s267 = scalar_lea.vmem %s2, %s266
          %s268 = smul.u32 4, %s19
          %s269 = ssub.s32 10, %s268
          %p270 = scmp.lt.s32.totalorder %s269, 4
          %s271 = scalar_select %p270, %s269, 4
          %s272 = smul.u32 128, %s271
          %s273 = smul.u32 %s272, 2
        $region36: #{tpu_custom_call.1} parent=23 // pred_fallthru
          _
      $region24: #{tpu_custom_call.1} parent=5 // pred_fallthru
        _
      %p274 = scmp.le.s32.totalorder 1, %s11
      %p275 = scmp.lt.s32.totalorder %s11, 7
      %p276 = pnand %p274, %p275
      %p277 = pneg %p276
      // Predicated region
      $region37: #{tpu_custom_call.1} parent=5 // pred_check
        _
      $region38: #{tpu_custom_call.1} parent=5 // pred_check_branch
        %279 = sbr.rel (%p276) target = $region40
      $region39: #{tpu_custom_call.1} parent=5 // pred_region
        %s280 = ssub.s32 %s11, 1
        %s281 = smul.u32 4, %s21
        %s282 = ssub.s32 10, %s281
        %p283 = scmp.lt.s32.totalorder %s282, 4
        %s284 = scalar_select %p283, %s282, 4
        %s285 = smul.u32 128, %s284
        %s286 = smul.u32 %s285, 2
        %p287 = scmp.lt.s32.totalorder %s20, 1
        %s288 = scalar_select %p287, %s20, 1
        %p289 = scmp.lt.s32.totalorder %s281, 9
        %s290 = scalar_select %p289, %s281, 9
        %s291 = smul.addr %s290, 2
        %s292 = smul.addr %s288, 20
        %s293 = sadd.s32 %s291, %s292
        %s294 = smul.addr %s293, 8
        %s295 = scalar_lea.vmem %s0, %s294
        %p296 = pneg %p51
        %p297 = pneg %p48
        %s298 = smul.u32 4, %s21
        %s299 = ssub.s32 10, %s298
        %p300 = scmp.lt.s32.totalorder %s299, 4
        %s301 = scalar_select %p300, %s299, 4
        %s302 = smul.u32 128, %s301
        %s303 = smul.u32 %s302, 2
        %p304 = scmp.lt.s32.totalorder %s20, 1
        %s305 = scalar_select %p304, %s20, 1
        %p306 = scmp.lt.s32.totalorder %s298, 9
        %s307 = scalar_select %p306, %s298, 9
        %s308 = smul.addr %s307, 2
        %s309 = smul.addr %s305, 20
        %s310 = sadd.s32 %s308, %s309
        %s311 = smul.addr %s310, 8
        %s312 = scalar_lea.vmem %s1, %s311
        %p313 = pneg %p79
        %p314 = pneg %p76
        %s315 = smul.u32 4, %s21
        %s316 = ssub.s32 10, %s315
        %p317 = scmp.lt.s32.totalorder %s316, 4
        %s318 = scalar_select %p317, %s316, 4
        %s319 = smul.u32 128, %s318
        %s320 = smul.u32 %s319, 2
        %p321 = scmp.lt.s32.totalorder %s20, 1
        %s322 = scalar_select %p321, %s20, 1
        %p323 = scmp.lt.s32.totalorder %s315, 9
        %s324 = scalar_select %p323, %s315, 9
        %s325 = smul.addr %s324, 2
        %s326 = smul.addr %s322, 20
        %s327 = sadd.s32 %s325, %s326
        %s328 = smul.addr %s327, 8
        %s329 = scalar_lea.vmem %s2, %s328
        %p330 = pneg %p107
        %p331 = pneg %p104
        %p332 = pneg %p128
        %p333 = pneg %p125
        %p334 = pneg %p149
        %p335 = pneg %p146
        %p336 = pneg %p177
        %p337 = pneg %p174
        %s338 = sand.u32 %s164, 1
        %s339 = sand.u32 %s164, 1
        %s340 = smul.addr %s339, 32
        %s341 = scalar_lea.vmem [#allocation2], %s340
        %s342 = smul.u32 4, %s21
        %s343 = ssub.s32 10, %s342
        %p344 = scmp.lt.s32.totalorder %s343, 4
        %s345 = scalar_select %p344, %s343, 4
        %s346 = smul.u32 128, %s345
        %s347 = smul.u32 %s346, 2
        %p348 = scmp.lt.s32.totalorder %s20, 1
        %s349 = scalar_select %p348, %s20, 1
        %p350 = scmp.lt.s32.totalorder %s342, 9
        %s351 = scalar_select %p350, %s342, 9
        %s352 = smul.addr %s351, 2
        %s353 = smul.addr %s349, 20
        %s354 = sadd.s32 %s352, %s353
        %s355 = smul.addr %s354, 8
        %s356 = scalar_lea.vmem %s0, %s355
        %s357 = smul.u32 4, %s21
        %s358 = ssub.s32 10, %s357
        %p359 = scmp.lt.s32.totalorder %s358, 4
        %s360 = scalar_select %p359, %s358, 4
        %s361 = smul.u32 128, %s360
        %s362 = smul.u32 %s361, 2
        %s363 = smul.u32 4, %s21
        %s364 = ssub.s32 10, %s363
        %p365 = scmp.lt.s32.totalorder %s364, 4
        %s366 = scalar_select %p365, %s364, 4
        %s367 = smul.u32 128, %s366
        %s368 = smul.u32 %s367, 2
        %p369 = scmp.lt.s32.totalorder %s20, 1
        %s370 = scalar_select %p369, %s20, 1
        %p371 = scmp.lt.s32.totalorder %s363, 9
        %s372 = scalar_select %p371, %s363, 9
        %s373 = smul.addr %s372, 2
        %s374 = smul.addr %s370, 20
        %s375 = sadd.s32 %s373, %s374
        %s376 = smul.addr %s375, 8
        %s377 = scalar_lea.vmem %s1, %s376
        %s378 = smul.u32 4, %s21
        %s379 = ssub.s32 10, %s378
        %p380 = scmp.lt.s32.totalorder %s379, 4
        %s381 = scalar_select %p380, %s379, 4
        %s382 = smul.u32 128, %s381
        %s383 = smul.u32 %s382, 2
        %s384 = smul.u32 4, %s21
        %s385 = ssub.s32 10, %s384
        %p386 = scmp.lt.s32.totalorder %s385, 4
        %s387 = scalar_select %p386, %s385, 4
        %s388 = smul.u32 128, %s387
        %s389 = smul.u32 %s388, 2
        %p390 = scmp.lt.s32.totalorder %s20, 1
        %s391 = scalar_select %p390, %s20, 1
        %p392 = scmp.lt.s32.totalorder %s384, 9
        %s393 = scalar_select %p392, %s384, 9
        %s394 = smul.addr %s393, 2
        %s395 = smul.addr %s391, 20
        %s396 = sadd.s32 %s394, %s395
        %s397 = smul.addr %s396, 8
        %s398 = scalar_lea.vmem %s2, %s397
        %s399 = smul.u32 4, %s21
        %s400 = ssub.s32 10, %s399
        %p401 = scmp.lt.s32.totalorder %s400, 4
        %s402 = scalar_select %p401, %s400, 4
        %s403 = smul.u32 128, %s402
        %s404 = smul.u32 %s403, 2
        %s405 = smul.u32 4, %s21
        %s406 = ssub.s32 10, %s405
        %p407 = scmp.lt.s32.totalorder %s406, 4
        %s408 = scalar_select %p407, %s406, 4
        %s409 = smul.u32 128, %s408
        %v410 = vld [vmem:[%s356] sm:$0xff]
        %v411 = vld [vmem:[%s356 + $0x10] sm:$0xff]
        %v412 = vld [vmem:[%s356 + $0x20] sm:$0xff]
        %v413 = vld [vmem:[%s356 + $0x30] sm:$0xff]
        %v414 = vld [vmem:[%s3] sm:$0x1]
        %416 = vset.pattern.permute.xlu0 0
        %417 = vperm.xlu0 %416, %v410
        %v418 = vpop.permute.xlu0 %417
        %421 = vset.pattern.permute.xlu0 0
        %422 = vperm.xlu0 %421, %v411
        %v423 = vpop.permute.xlu0 %422
        %426 = vset.pattern.permute.xlu0 0
        %427 = vperm.xlu0 %426, %v412
        %v428 = vpop.permute.xlu0 %427
        %431 = vset.pattern.permute.xlu0 0
        %432 = vperm.xlu0 %431, %v413
        %v433 = vpop.permute.xlu0 %432
        %v436 = vlaneseq
        %v437 = vshrl.u32 %v436, 7
        %v438 = vsub.s32 0, %v437
        %v439 = vrot.slane %v414, %v438
        %v441 = vmul.f32 %v418, %v439
        %v442 = vmul.f32 %v423, %v439
        %v443 = vmul.f32 %v428, %v439
        %v444 = vmul.f32 %v433, %v439
        %v445 = vadd.f32 %v441, 0.0
        %v446 = vadd.f32 %v442, 0.0
        %v447 = vadd.f32 %v443, 0.0
        %v448 = vadd.f32 %v444, 0.0
        %v449 = vld [vmem:[%s356 + $0x1] sm:$0xff]
        %v450 = vld [vmem:[%s356 + $0x11] sm:$0xff]
        %v451 = vld [vmem:[%s356 + $0x21] sm:$0xff]
        %v452 = vld [vmem:[%s356 + $0x31] sm:$0xff]
        %s453 = scalar_lea.vmem %s3, 1
        %v454 = vld [vmem:[%s453] sm:$0x1]
        %456 = vset.pattern.permute.xlu0 0
        %457 = vperm.xlu0 %456, %v449
        %v458 = vpop.permute.xlu0 %457
        %461 = vset.pattern.permute.xlu0 0
        %462 = vperm.xlu0 %461, %v450
        %v463 = vpop.permute.xlu0 %462
        %466 = vset.pattern.permute.xlu0 0
        %467 = vperm.xlu0 %466, %v451
        %v468 = vpop.permute.xlu0 %467
        %471 = vset.pattern.permute.xlu0 0
        %472 = vperm.xlu0 %471, %v452
        %v473 = vpop.permute.xlu0 %472
        %v476 = vlaneseq
        %v477 = vshrl.u32 %v476, 7
        %v478 = vsub.s32 0, %v477
        %v479 = vrot.slane %v454, %v478
        %v481 = vmul.f32 %v458, %v479
        %v482 = vmul.f32 %v463, %v479
        %v483 = vmul.f32 %v468, %v479
        %v484 = vmul.f32 %v473, %v479
        %v485 = vadd.f32 %v445, %v481
        %v486 = vadd.f32 %v446, %v482
        %v487 = vadd.f32 %v447, %v483
        %v488 = vadd.f32 %v448, %v484
        %v489 = vld [vmem:[%s356 + $0x2] sm:$0xff]
        %v490 = vld [vmem:[%s356 + $0x12] sm:$0xff]
        %v491 = vld [vmem:[%s356 + $0x22] sm:$0xff]
        %v492 = vld [vmem:[%s356 + $0x32] sm:$0xff]
        %s493 = scalar_lea.vmem %s3, 2
        %v494 = vld [vmem:[%s493] sm:$0x1]
        %496 = vset.pattern.permute.xlu0 0
        %497 = vperm.xlu0 %496, %v489
        %v498 = vpop.permute.xlu0 %497
        %501 = vset.pattern.permute.xlu0 0
        %502 = vperm.xlu0 %501, %v490
        %v503 = vpop.permute.xlu0 %502
        %506 = vset.pattern.permute.xlu0 0
        %507 = vperm.xlu0 %506, %v491
        %v508 = vpop.permute.xlu0 %507
        %511 = vset.pattern.permute.xlu0 0
        %512 = vperm.xlu0 %511, %v492
        %v513 = vpop.permute.xlu0 %512
        %v516 = vlaneseq
        %v517 = vshrl.u32 %v516, 7
        %v518 = vsub.s32 0, %v517
        %v519 = vrot.slane %v494, %v518
        %v521 = vmul.f32 %v498, %v519
        %v522 = vmul.f32 %v503, %v519
        %v523 = vmul.f32 %v508, %v519
        %v524 = vmul.f32 %v513, %v519
        %v525 = vadd.f32 %v485, %v521
        %v526 = vadd.f32 %v486, %v522
        %v527 = vadd.f32 %v487, %v523
        %v528 = vadd.f32 %v488, %v524
        %v529 = vld [vmem:[%s377] sm:$0xff]
        %v530 = vld [vmem:[%s377 + $0x10] sm:$0xff]
        %v531 = vld [vmem:[%s377 + $0x20] sm:$0xff]
        %v532 = vld [vmem:[%s377 + $0x30] sm:$0xff]
        %s533 = scalar_lea.vmem %s3, 3
        %v534 = vld [vmem:[%s533] sm:$0x1]
        %536 = vset.pattern.permute.xlu0 0
        %537 = vperm.xlu0 %536, %v529
        %v538 = vpop.permute.xlu0 %537
        %541 = vset.pattern.permute.xlu0 0
        %542 = vperm.xlu0 %541, %v530
        %v543 = vpop.permute.xlu0 %542
        %546 = vset.pattern.permute.xlu0 0
        %547 = vperm.xlu0 %546, %v531
        %v548 = vpop.permute.xlu0 %547
        %551 = vset.pattern.permute.xlu0 0
        %552 = vperm.xlu0 %551, %v532
        %v553 = vpop.permute.xlu0 %552
        %v556 = vlaneseq
        %v557 = vshrl.u32 %v556, 7
        %v558 = vsub.s32 0, %v557
        %v559 = vrot.slane %v534, %v558
        %v561 = vmul.f32 %v538, %v559
        %v562 = vmul.f32 %v543, %v559
        %v563 = vmul.f32 %v548, %v559
        %v564 = vmul.f32 %v553, %v559
        %v565 = vadd.f32 %v525, %v561
        %v566 = vadd.f32 %v526, %v562
        %v567 = vadd.f32 %v527, %v563
        %v568 = vadd.f32 %v528, %v564
        %v569 = vld [vmem:[%s377 + $0x1] sm:$0xff]
        %v570 = vld [vmem:[%s377 + $0x11] sm:$0xff]
        %v571 = vld [vmem:[%s377 + $0x21] sm:$0xff]
        %v572 = vld [vmem:[%s377 + $0x31] sm:$0xff]
        %s573 = scalar_lea.vmem %s3, 4
        %v574 = vld [vmem:[%s573] sm:$0x1]
        %576 = vset.pattern.permute.xlu0 0
        %577 = vperm.xlu0 %576, %v569
        %v578 = vpop.permute.xlu0 %577
        %581 = vset.pattern.permute.xlu0 0
        %582 = vperm.xlu0 %581, %v570
        %v583 = vpop.permute.xlu0 %582
        %586 = vset.pattern.permute.xlu0 0
        %587 = vperm.xlu0 %586, %v571
        %v588 = vpop.permute.xlu0 %587
        %591 = vset.pattern.permute.xlu0 0
        %592 = vperm.xlu0 %591, %v572
        %v593 = vpop.permute.xlu0 %592
        %v596 = vlaneseq
        %v597 = vshrl.u32 %v596, 7
        %v598 = vsub.s32 0, %v597
        %v599 = vrot.slane %v574, %v598
        %v601 = vmul.f32 %v578, %v599
        %v602 = vmul.f32 %v583, %v599
        %v603 = vmul.f32 %v588, %v599
        %v604 = vmul.f32 %v593, %v599
        %v605 = vadd.f32 %v565, %v601
        %v606 = vadd.f32 %v566, %v602
        %v607 = vadd.f32 %v567, %v603
        %v608 = vadd.f32 %v568, %v604
        %v609 = vld [vmem:[%s377 + $0x2] sm:$0xff]
        %v610 = vld [vmem:[%s377 + $0x12] sm:$0xff]
        %v611 = vld [vmem:[%s377 + $0x22] sm:$0xff]
        %v612 = vld [vmem:[%s377 + $0x32] sm:$0xff]
        %s613 = scalar_lea.vmem %s3, 5
        %v614 = vld [vmem:[%s613] sm:$0x1]
        %616 = vset.pattern.permute.xlu0 0
        %617 = vperm.xlu0 %616, %v609
        %v618 = vpop.permute.xlu0 %617
        %621 = vset.pattern.permute.xlu0 0
        %622 = vperm.xlu0 %621, %v610
        %v623 = vpop.permute.xlu0 %622
        %626 = vset.pattern.permute.xlu0 0
        %627 = vperm.xlu0 %626, %v611
        %v628 = vpop.permute.xlu0 %627
        %631 = vset.pattern.permute.xlu0 0
        %632 = vperm.xlu0 %631, %v612
        %v633 = vpop.permute.xlu0 %632
        %v636 = vlaneseq
        %v637 = vshrl.u32 %v636, 7
        %v638 = vsub.s32 0, %v637
        %v639 = vrot.slane %v614, %v638
        %v641 = vmul.f32 %v618, %v639
        %v642 = vmul.f32 %v623, %v639
        %v643 = vmul.f32 %v628, %v639
        %v644 = vmul.f32 %v633, %v639
        %v645 = vadd.f32 %v605, %v641
        %v646 = vadd.f32 %v606, %v642
        %v647 = vadd.f32 %v607, %v643
        %v648 = vadd.f32 %v608, %v644
        %v649 = vld [vmem:[%s398] sm:$0xff]
        %v650 = vld [vmem:[%s398 + $0x10] sm:$0xff]
        %v651 = vld [vmem:[%s398 + $0x20] sm:$0xff]
        %v652 = vld [vmem:[%s398 + $0x30] sm:$0xff]
        %s653 = scalar_lea.vmem %s3, 6
        %v654 = vld [vmem:[%s653] sm:$0x1]
        %656 = vset.pattern.permute.xlu0 0
        %657 = vperm.xlu0 %656, %v649
        %v658 = vpop.permute.xlu0 %657
        %661 = vset.pattern.permute.xlu0 0
        %662 = vperm.xlu0 %661, %v650
        %v663 = vpop.permute.xlu0 %662
        %666 = vset.pattern.permute.xlu0 0
        %667 = vperm.xlu0 %666, %v651
        %v668 = vpop.permute.xlu0 %667
        %671 = vset.pattern.permute.xlu0 0
        %672 = vperm.xlu0 %671, %v652
        %v673 = vpop.permute.xlu0 %672
        %v676 = vlaneseq
        %v677 = vshrl.u32 %v676, 7
        %v678 = vsub.s32 0, %v677
        %v679 = vrot.slane %v654, %v678
        %v681 = vmul.f32 %v658, %v679
        %v682 = vmul.f32 %v663, %v679
        %v683 = vmul.f32 %v668, %v679
        %v684 = vmul.f32 %v673, %v679
        %v685 = vadd.f32 %v645, %v681
        %v686 = vadd.f32 %v646, %v682
        %v687 = vadd.f32 %v647, %v683
        %v688 = vadd.f32 %v648, %v684
        %v689 = vld [vmem:[%s398 + $0x1] sm:$0xff]
        %v690 = vld [vmem:[%s398 + $0x11] sm:$0xff]
        %v691 = vld [vmem:[%s398 + $0x21] sm:$0xff]
        %v692 = vld [vmem:[%s398 + $0x31] sm:$0xff]
        %s693 = scalar_lea.vmem %s3, 7
        %v694 = vld [vmem:[%s693] sm:$0x1]
        %696 = vset.pattern.permute.xlu0 0
        %697 = vperm.xlu0 %696, %v689
        %v698 = vpop.permute.xlu0 %697
        %701 = vset.pattern.permute.xlu0 0
        %702 = vperm.xlu0 %701, %v690
        %v703 = vpop.permute.xlu0 %702
        %706 = vset.pattern.permute.xlu0 0
        %707 = vperm.xlu0 %706, %v691
        %v708 = vpop.permute.xlu0 %707
        %711 = vset.pattern.permute.xlu0 0
        %712 = vperm.xlu0 %711, %v692
        %v713 = vpop.permute.xlu0 %712
        %v716 = vlaneseq
        %v717 = vshrl.u32 %v716, 7
        %v718 = vsub.s32 0, %v717
        %v719 = vrot.slane %v694, %v718
        %v721 = vmul.f32 %v698, %v719
        %v722 = vmul.f32 %v703, %v719
        %v723 = vmul.f32 %v708, %v719
        %v724 = vmul.f32 %v713, %v719
        %v725 = vadd.f32 %v685, %v721
        %v726 = vadd.f32 %v686, %v722
        %v727 = vadd.f32 %v687, %v723
        %v728 = vadd.f32 %v688, %v724
        %v729 = vld [vmem:[%s398 + $0x2] sm:$0xff]
        %v730 = vld [vmem:[%s398 + $0x12] sm:$0xff]
        %v731 = vld [vmem:[%s398 + $0x22] sm:$0xff]
        %v732 = vld [vmem:[%s398 + $0x32] sm:$0xff]
        %s733 = scalar_lea.vmem %s3, 8
        %v734 = vld [vmem:[%s733] sm:$0x1]
        %736 = vset.pattern.permute.xlu0 0
        %737 = vperm.xlu0 %736, %v729
        %v738 = vpop.permute.xlu0 %737
        %741 = vset.pattern.permute.xlu0 0
        %742 = vperm.xlu0 %741, %v730
        %v743 = vpop.permute.xlu0 %742
        %746 = vset.pattern.permute.xlu0 0
        %747 = vperm.xlu0 %746, %v731
        %v748 = vpop.permute.xlu0 %747
        %751 = vset.pattern.permute.xlu0 0
        %752 = vperm.xlu0 %751, %v732
        %v753 = vpop.permute.xlu0 %752
        %v756 = vlaneseq
        %v757 = vshrl.u32 %v756, 7
        %v758 = vsub.s32 0, %v757
        %v759 = vrot.slane %v734, %v758
        %v761 = vmul.f32 %v738, %v759
        %v762 = vmul.f32 %v743, %v759
        %v763 = vmul.f32 %v748, %v759
        %v764 = vmul.f32 %v753, %v759
        %v765 = vadd.f32 %v725, %v761
        %v766 = vadd.f32 %v726, %v762
        %v767 = vadd.f32 %v727, %v763
        %v768 = vadd.f32 %v728, %v764
        %v769 = vld [vmem:[%s4] sm:$0x1]
        %v771 = vlaneseq
        %v772 = vshrl.u32 %v771, 7
        %v773 = vsub.s32 0, %v772
        %v774 = vrot.slane %v769, %v773
        %v776 = vadd.f32 %v765, %v774
        %v777 = vadd.f32 %v766, %v774
        %v778 = vadd.f32 %v767, %v774
        %v779 = vadd.f32 %v768, %v774
        %784 = vrot.lane.b32.xlu0 %v776, 124
        %v785 = vpop.permute.xlu0 %784
        %786 = vrot.lane.b32.xlu0 %v777, 124
        %v787 = vpop.permute.xlu0 %786
        %788 = vrot.lane.b32.xlu0 %v778, 124
        %v789 = vpop.permute.xlu0 %788
        %790 = vrot.lane.b32.xlu0 %v779, 124
        %v791 = vpop.permute.xlu0 %790
        %v796 = vmax.f32 %v776, %v785
        %v797 = vmax.f32 %v777, %v787
        %v798 = vmax.f32 %v778, %v789
        %v799 = vmax.f32 %v779, %v791
        %vm800 = vcmask 31744
        %801 = vst.msk [vmem:[%s341] sm:$0xff] %vm800, %v796
        %802 = vst.msk [vmem:[%s341 + $0x8] sm:$0xff] %vm800, %v797
        %803 = vst.msk [vmem:[%s341 + $0x10] sm:$0xff] %vm800, %v798
        %804 = vst.msk [vmem:[%s341 + $0x18] sm:$0xff] %vm800, %v799
        %s805 = sand.u32 %s164, 1
        %s806 = sand.u32 %s164, 1
        %s807 = smul.addr %s806, 32
        %s808 = scalar_lea.vmem [#allocation2], %s807
        // Predicated region
        $region41: #{tpu_custom_call.1} parent=39 // pred_check
          %p809 = pneg %p174
        $region42: #{tpu_custom_call.1} parent=39 // pred_check_branch
          %811 = sbr.rel (%p809) target = $region44
        $region43: #{tpu_custom_call.1} parent=39 // pred_region
          %s812 = smul.u32 4, %s21
          %s813 = ssub.s32 10, %s812
          %p814 = scmp.lt.s32.totalorder %s813, 4
          %s815 = scalar_select %p814, %s813, 4
          %s816 = smul.u32 128, %s815
          %p817 = scmp.ne.s32.totalorder 0, %s816
          %s818 = smul.addr %s20, 10
          %s819 = sadd.s32 %s812, %s818
          %s820 = smul.addr %s819, 8
          %s821 = scalar_lea.vmem %s5, %s820
          // Predicated region
          $region45: #{tpu_custom_call.1} parent=43 // pred_check
            %p822 = pneg %p817
          $region46: #{tpu_custom_call.1} parent=43 // pred_check_branch
            %824 = sbr.rel (%p822) target = $region48
          $region47: #{tpu_custom_call.1} parent=43 // pred_region
            // Predicated region
            $region49: #{tpu_custom_call.1} parent=47 // pred_check
              _
            $region50: #{tpu_custom_call.1} parent=47 // pred_check_branch
              %826 = sbr.rel (0) target = $region52
            $region51: #{tpu_custom_call.1} parent=47 // pred_region
              // Predicated region
              $region71: #{tpu_custom_call.1} parent=51 // pred_check
                _
              $region72: #{tpu_custom_call.1} parent=51 // pred_check_branch
                %881 = sbr.rel (0) target = $region74
              $region73: #{tpu_custom_call.1} parent=51 // pred_region
                %s882 = sshrl.u32 %s815, 2
                // While loop
                $region75: #{tpu_custom_call.1} parent=73 // loop_pre_header
                  _
                $region76: #{tpu_custom_call.1} parent=73 // loop_header
                  %s884 = sphi 0, %s886
                  %p885 = scmp.ge.s32.totalorder %s884, %s882
                  %s889 = sphi 0, %s902
                  %s890 = sphi %s808, %s905
                  %s891 = sphi %s821, %s906
                $region77: #{tpu_custom_call.1} parent=73 // loop_header_branch
                  %888 = sbr.rel (%p885) target = $region81
                $region78: #{tpu_custom_call.1} parent=73 // loop_body
                  %v892 = vld [vmem:[%s890] sm:$0xff]
                  %893 = vst [vmem:[%s891] sm:$0xff] %v892
                  %v894 = vld [vmem:[%s890 + $0x8] sm:$0xff]
                  %895 = vst [vmem:[%s891 + $0x8] sm:$0xff] %v894
                  %v896 = vld [vmem:[%s890 + $0x10] sm:$0xff]
                  %897 = vst [vmem:[%s891 + $0x10] sm:$0xff] %v896
                  %v898 = vld [vmem:[%s890 + $0x18] sm:$0xff]
                  %899 = vst [vmem:[%s891 + $0x18] sm:$0xff] %v898
                  %s900 = sadd.s32 1, %s889
                  %p901 = scmp.ge.s32.totalorder %s900, %s882
                  %s902 = scalar_select %p901, 0, %s900
                  %s903 = smul.u32 %s902, 32
                  %s904 = smul.u32 %s902, 32
                  %s905 = scalar_lea.vmem %s808, %s903 [#allocation2]
                  %s906 = scalar_lea.vmem %s821, %s904
                $region79: #{tpu_custom_call.1} parent=73 // loop_footer
                  %s886 = sadd.s32 %s884, 1
                $region80: #{tpu_custom_call.1} parent=73 // loop_footer_branch
                  %883 = sbr.rel target = $region76
                $region81: #{tpu_custom_call.1} parent=73 // loop_exit
                  _
                %s907 = sshrl.u32 %s815, 2
                %s908 = sand.u32 %s815, 3
                %s909 = smul.u32 %s907, 4
                %s910 = smul.u32 8, %s909
                %s911 = scalar_lea.vmem %s808, %s910 [#allocation2]
                %s912 = smul.u32 8, %s909
                %s913 = scalar_lea.vmem %s821, %s912
                // While loop
                $region82: #{tpu_custom_call.1} parent=73 // loop_pre_header
                  _
                $region83: #{tpu_custom_call.1} parent=73 // loop_header
                  %s915 = sphi 0, %s917
                  %p916 = scmp.ge.s32.totalorder %s915, %s908
                  %s920 = sphi 0, %s927
                  %s921 = sphi %s911, %s930
                  %s922 = sphi %s913, %s931
                $region84: #{tpu_custom_call.1} parent=73 // loop_header_branch
                  %919 = sbr.rel (%p916) target = $region88
                $region85: #{tpu_custom_call.1} parent=73 // loop_body
                  %v923 = vld [vmem:[%s921] sm:$0xff]
                  %924 = vst [vmem:[%s922] sm:$0xff] %v923
                  %s925 = sadd.s32 1, %s920
                  %p926 = scmp.ge.s32.totalorder %s925, %s908
                  %s927 = scalar_select %p926, 0, %s925
                  %s928 = smul.u32 %s927, 8
                  %s929 = smul.u32 %s927, 8
                  %s930 = scalar_lea.vmem %s911, %s928 [#allocation2]
                  %s931 = scalar_lea.vmem %s913, %s929
                $region86: #{tpu_custom_call.1} parent=73 // loop_footer
                  %s917 = sadd.s32 %s915, 1
                $region87: #{tpu_custom_call.1} parent=73 // loop_footer_branch
                  %914 = sbr.rel target = $region83
                $region88: #{tpu_custom_call.1} parent=73 // loop_exit
                  _
              $region74: #{tpu_custom_call.1} parent=51 // pred_fallthru
                _
              // Predicated region
              $region89: #{tpu_custom_call.1} parent=51 // pred_check
                _
              $region90: #{tpu_custom_call.1} parent=51 // pred_check_branch
                %933 = sbr.rel target = $region92
              $region91: #{tpu_custom_call.1} parent=51 // pred_region
                _
              $region92: #{tpu_custom_call.1} parent=51 // pred_fallthru
                _
            $region52: #{tpu_custom_call.1} parent=47 // pred_fallthru
              _
            // Predicated region
            $region53: #{tpu_custom_call.1} parent=47 // pred_check
              _
            $region54: #{tpu_custom_call.1} parent=47 // pred_check_branch
              %828 = sbr.rel target = $region56
            $region55: #{tpu_custom_call.1} parent=47 // pred_region
              %s830 = sshrl.u32 %s815, 2
              // While loop
              $region57: #{tpu_custom_call.1} parent=55 // loop_pre_header
                _
              $region58: #{tpu_custom_call.1} parent=55 // loop_header
                %s832 = sphi 0, %s834
                %p833 = scmp.ge.s32.totalorder %s832, %s830
                %s837 = sphi 0, %s850
                %s838 = sphi %s808, %s853
                %s839 = sphi %s821, %s854
              $region59: #{tpu_custom_call.1} parent=55 // loop_header_branch
                %836 = sbr.rel (%p833) target = $region63
              $region60: #{tpu_custom_call.1} parent=55 // loop_body
                %v840 = vld [vmem:[%s838] sm:$0xff]
                %841 = vst [vmem:[%s839] sm:$0xff] %v840
                %v842 = vld [vmem:[%s838 + $0x8] sm:$0xff]
                %843 = vst [vmem:[%s839 + $0x8] sm:$0xff] %v842
                %v844 = vld [vmem:[%s838 + $0x10] sm:$0xff]
                %845 = vst [vmem:[%s839 + $0x10] sm:$0xff] %v844
                %v846 = vld [vmem:[%s838 + $0x18] sm:$0xff]
                %847 = vst [vmem:[%s839 + $0x18] sm:$0xff] %v846
                %s848 = sadd.s32 1, %s837
                %p849 = scmp.ge.s32.totalorder %s848, %s830
                %s850 = scalar_select %p849, 0, %s848
                %s851 = smul.u32 %s850, 32
                %s852 = smul.u32 %s850, 32
                %s853 = scalar_lea.vmem %s808, %s851 [#allocation2]
                %s854 = scalar_lea.vmem %s821, %s852
              $region61: #{tpu_custom_call.1} parent=55 // loop_footer
                %s834 = sadd.s32 %s832, 1
              $region62: #{tpu_custom_call.1} parent=55 // loop_footer_branch
                %831 = sbr.rel target = $region58
              $region63: #{tpu_custom_call.1} parent=55 // loop_exit
                _
              %s855 = sshrl.u32 %s815, 2
              %s856 = sand.u32 %s815, 3
              %s857 = smul.u32 %s855, 4
              %s858 = smul.u32 8, %s857
              %s859 = scalar_lea.vmem %s808, %s858 [#allocation2]
              %s860 = smul.u32 8, %s857
              %s861 = scalar_lea.vmem %s821, %s860
              // While loop
              $region64: #{tpu_custom_call.1} parent=55 // loop_pre_header
                _
              $region65: #{tpu_custom_call.1} parent=55 // loop_header
                %s863 = sphi 0, %s865
                %p864 = scmp.ge.s32.totalorder %s863, %s856
                %s868 = sphi 0, %s875
                %s869 = sphi %s859, %s878
                %s870 = sphi %s861, %s879
              $region66: #{tpu_custom_call.1} parent=55 // loop_header_branch
                %867 = sbr.rel (%p864) target = $region70
              $region67: #{tpu_custom_call.1} parent=55 // loop_body
                %v871 = vld [vmem:[%s869] sm:$0xff]
                %872 = vst [vmem:[%s870] sm:$0xff] %v871
                %s873 = sadd.s32 1, %s868
                %p874 = scmp.ge.s32.totalorder %s873, %s856
                %s875 = scalar_select %p874, 0, %s873
                %s876 = smul.u32 %s875, 8
                %s877 = smul.u32 %s875, 8
                %s878 = scalar_lea.vmem %s859, %s876 [#allocation2]
                %s879 = scalar_lea.vmem %s861, %s877
              $region68: #{tpu_custom_call.1} parent=55 // loop_footer
                %s865 = sadd.s32 %s863, 1
              $region69: #{tpu_custom_call.1} parent=55 // loop_footer_branch
                %862 = sbr.rel target = $region65
              $region70: #{tpu_custom_call.1} parent=55 // loop_exit
                _
            $region56: #{tpu_custom_call.1} parent=47 // pred_fallthru
              _
          $region48: #{tpu_custom_call.1} parent=43 // pred_fallthru
            _
          %934 = vnop
        $region44: #{tpu_custom_call.1} parent=39 // pred_fallthru
          _
      $region40: #{tpu_custom_call.1} parent=5 // pred_fallthru
        _
      %p935 = scmp.le.s32.totalorder 2, %s11
      // Predicated region
      $region93: #{tpu_custom_call.1} parent=5 // pred_check
        %p936 = pneg %p935
      $region94: #{tpu_custom_call.1} parent=5 // pred_check_branch
        %938 = sbr.rel (%p936) target = $region96
      $region95: #{tpu_custom_call.1} parent=5 // pred_region
        %s939 = ssub.s32 %s11, 2
        // Predicated region
        $region97: #{tpu_custom_call.1} parent=95 // pred_check
          %p940 = pneg %p180
        $region98: #{tpu_custom_call.1} parent=95 // pred_check_branch
          %942 = sbr.rel (%p940) target = $region100
        $region99: #{tpu_custom_call.1} parent=95 // pred_region
          %s943 = sand.u32 %s165, 1
          %s944 = sand.u32 %s165, 1
          %s945 = smul.addr %s944, 32
          %s946 = scalar_lea.vmem [#allocation2], %s945
        $region100: #{tpu_custom_call.1} parent=95 // pred_fallthru
          _
      $region96: #{tpu_custom_call.1} parent=5 // pred_fallthru
        _
    $region6: #{tpu_custom_call.1} parent=1 // loop_footer
      %s15 = sadd.s32 1, %s11
    $region7: #{tpu_custom_call.1} parent=1 // loop_footer_branch
      %10 = sbr.rel target = $region3
    $region8: #{tpu_custom_call.1} parent=1 // loop_exit
      _

</llo_original>
